<compile_context>
chip_gen: v5e
topology: v5e:2x2
jax: 0.10.0
libtpu: 0.0.40
codegen_flags: <defaults>
</compile_context>

<pallas_src>
import jax
import jax.numpy as jnp
from jax.experimental import pallas as pl
from jax.experimental.pallas import tpu as pltpu

# ---- problem sizes (small, consistent with an NCHW conv classifier) ----------
B, C, H, W = 2, 4, 16, 16          # input x: (B, C, H, W)  -- PyTorch NCHW
F = 8                              # conv output channels
KH = KW = 3                        # 3x3 conv, padding=1 ('same')
NUM_CLASSES = 10
HP, WP = H + 2, W + 2              # padded spatial dims
BAND = B * HP - (KH - 1)           # rows of the shifted conv band (= 34)

assert W * F == 128                # conv output is laid out lane-dense (rows, W*F)


# ------------------------------- Pallas kernels --------------------------------
def _backbone(xp_ref, wall_ref, bcrow_ref, lmat_ref, rfc_ref, bf_ref):
    """conv(3x3,'same') -> ReLU -> global-avg-pool -> linear, all on the MXU.

    xp_ref    : (B*HP, WP*C)        padded NHWC image, rows=(b,y), lanes=(x,c)
    wall_ref  : (KH*WP*C, W*F)      3 stacked banded conv-weight taps (dx folded in)
    bcrow_ref : (1, W*F)            conv bias tiled over x
    lmat_ref  : (B, BAND)           per-batch row-select / (1/(H*W)) pooling matrix
    rfc_ref   : (W*F, NUM_CLASSES)  x-sum + fc weight, folded: tile(wf, (W, 1))
    bf_ref    : (1, NUM_CLASSES)
    returns   : (B, NUM_CLASSES) f32 logits
    """
    xp = xp_ref[...]                                               # (B*HP, WP*C)

    # 3x3 conv as 3 banded matmuls accumulated in f32 (all MXU work).  Rows
    # that straddle a batch boundary compute garbage and are zeroed by lmat.
    conv = jnp.zeros((BAND, W * F), jnp.float32)
    for dy in range(KH):
        band = xp[dy:dy + BAND, :]                                 # (BAND, WP*C)
        conv = conv + jnp.dot(band,
                              wall_ref[dy * WP * C:(dy + 1) * WP * C, :],
                              preferred_element_type=jnp.float32)  # (BAND, W*F)
    conv = jnp.maximum(conv + bcrow_ref[...], 0.0)                 # bias + ReLU

    # Row selection + global average pool + fc, as two small MXU matmuls.
    rowsum = jnp.dot(lmat_ref[...], conv,
                     preferred_element_type=jnp.float32)           # (B, W*F)
    logits = jnp.dot(rowsum, rfc_ref[...],
                     preferred_element_type=jnp.float32) + bf_ref[...]  # (B, NC)
    return logits


def _train_kernel(tgt_ref, xp_ref, wall_ref, bcrow_ref, lmat_ref, rfc_ref,
                  bf_ref, out_ref):
    """Training path: batch-mean cross-entropy.  tgt_ref is an SMEM (B,) int32
    scalar-prefetch ref; out_ref is a lane-dense (8, 128) slab (loss broadcast)."""
    logits = _backbone(xp_ref, wall_ref, bcrow_ref, lmat_ref, rfc_ref, bf_ref)

    # Stable log-sum-exp cross-entropy, targets gathered via SMEM scalars.
    m = jnp.max(logits, axis=-1, keepdims=True)                          # (B, 1)
    lse = m + jnp.log(jnp.sum(jnp.exp(logits - m), axis=-1, keepdims=True))
    lane = jax.lax.broadcasted_iota(jnp.int32, (B, NUM_CLASSES), 1)
    tgt_col = jnp.concatenate(
        [jnp.full((1, 1), tgt_ref[b], dtype=jnp.int32) for b in range(B)],
        axis=0)                                                          # (B, 1)
    picked = jnp.sum(jnp.where(lane == tgt_col, logits, 0.0),
                     axis=-1, keepdims=True)                             # (B, 1)
    loss = jnp.sum(lse - picked, axis=0, keepdims=True) * (1.0 / B)      # (1, 1)

    out_ref[...] = jnp.zeros((8, 128), jnp.float32) + loss               # unmasked vst


def _eval_kernel(xp_ref, wall_ref, bcrow_ref, lmat_ref, rfc_ref, bf_ref, out_ref):
    """Eval path: logits only (no CE work, no target input)."""
    logits = _backbone(xp_ref, wall_ref, bcrow_ref, lmat_ref, rfc_ref, bf_ref)
    logits_pad = jnp.concatenate(
        [logits, jnp.zeros((B, 128 - NUM_CLASSES), jnp.float32)], axis=1)   # (B, 128)
    out_ref[...] = jnp.concatenate(
        [logits_pad, jnp.zeros((8 - B, 128), jnp.float32)], axis=0)         # (8, 128)


# ------------------------------- pallas_call wiring ----------------------------
def _full2(i, *_):                     # single grid step; prefetch refs ignored
    return (0, 0)


def _tensor_specs():
    return [
        pl.BlockSpec((B * HP, WP * C), _full2),         # padded image (36, 72)
        pl.BlockSpec((KH * WP * C, W * F), _full2),     # banded conv weights (216, 128)
        pl.BlockSpec((1, W * F), _full2),               # conv bias row
        pl.BlockSpec((B, BAND), _full2),                # row-select / pool matrix
        pl.BlockSpec((W * F, NUM_CLASSES), _full2),     # folded pool+fc weight
        pl.BlockSpec((1, NUM_CLASSES), _full2),         # fc bias
    ]


_SLAB = jax.ShapeDtypeStruct((8, 128), jnp.float32)

_train_call = pl.pallas_call(
    _train_kernel,
    out_shape=_SLAB,
    grid_spec=pltpu.PrefetchScalarGridSpec(
        num_scalar_prefetch=1,                 # targets -> SMEM
        grid=(1,),                             # whole batch in one step
        in_specs=_tensor_specs(),
        out_specs=pl.BlockSpec((8, 128), _full2)),
    compiler_params=pltpu.CompilerParams(dimension_semantics=("arbitrary",)),
)

_eval_call = pl.pallas_call(
    _eval_kernel,
    out_shape=_SLAB,
    grid_spec=pltpu.PrefetchScalarGridSpec(
        num_scalar_prefetch=0,
        grid=(1,),
        in_specs=_tensor_specs(),
        out_specs=pl.BlockSpec((8, 128), _full2)),
    compiler_params=pltpu.CompilerParams(dimension_semantics=("arbitrary",)),
)


# --------------------------------- glue (JAX) ----------------------------------
def _prep_inputs(params, image_nchw):
    """Layout plumbing: NCHW -> padded NHWC 2-D slab, and folded weight matrices."""
    x_nhwc = jnp.transpose(image_nchw, (0, 2, 3, 1))               # (B, H, W, C)
    xp = jnp.pad(x_nhwc, ((0, 0), (1, 1), (1, 1), (0, 0)))
    xp2 = xp.reshape(B * HP, WP * C)                               # (36, 72)

    # Per-dy banded weight: row block (x+dx)*C holds w[dy, dx] for output x.
    w_hwio = jnp.transpose(params["w_conv"], (2, 3, 1, 0)).astype(jnp.float32)  # (3,3,C,F)
    eye_w = jnp.eye(W, dtype=jnp.float32)
    taps = []
    for dy in range(KH):
        wdy = jnp.zeros((WP * C, W * F), jnp.float32)
        for dx in range(KW):
            blk = jnp.kron(eye_w, w_hwio[dy, dx])                  # (W*C, W*F)
            wdy = wdy + jnp.pad(blk, ((dx * C, (KW - 1 - dx) * C), (0, 0)))
        taps.append(wdy)
    w_all = jnp.concatenate(taps, axis=0)                          # (KH*WP*C, W*F)

    bc_row = jnp.tile(params["b_conv"].astype(jnp.float32), W).reshape(1, W * F)

    # Per-batch valid-row selector, already scaled by 1/(H*W) (pooling mean).
    r = jnp.arange(BAND)[None, :]
    b = jnp.arange(B)[:, None]
    lmat = jnp.where((r >= b * HP) & (r < b * HP + H),
                     1.0 / (H * W), 0.0).astype(jnp.float32)       # (B, BAND)

    wf = params["w_fc"].astype(jnp.float32).T                      # (F, NUM_CLASSES)
    rfc = jnp.tile(wf, (W, 1))                                     # (W*F, NUM_CLASSES)
    bf = params["b_fc"].astype(jnp.float32).reshape(1, NUM_CLASSES)
    return xp2, w_all, bc_row, lmat, rfc, bf


@jax.jit
def _train_fn(params, image, target):
    inputs = _prep_inputs(params, image)
    slab = _train_call(target.astype(jnp.int32), *inputs)
    return slab[0, 0]


@jax.jit
def _eval_fn(params, image):
    inputs = _prep_inputs(params, image)
    slab = _eval_call(*inputs)
    return slab[:B, :NUM_CLASSES]


def init_params(key):
    """Deterministic synthetic parameters in PyTorch layouts."""
    k1, k2, k3, k4 = jax.random.split(key, 4)
    return dict(
        w_conv=jax.random.normal(k1, (F, C, KH, KW), jnp.float32) * 0.1,  # (out,in,kh,kw)
        b_conv=jax.random.normal(k2, (F,), jnp.float32) * 0.1,
        w_fc=jax.random.normal(k3, (NUM_CLASSES, F), jnp.float32) * 0.1,  # (out,in)
        b_fc=jax.random.normal(k4, (NUM_CLASSES,), jnp.float32) * 0.1,
    )


class ModelWithLoss:
    """JAX/Pallas analogue of the PyTorch ModelWithLoss wrapper.

    # TODO(synk): the PyTorch module wraps an abstract `model`/`loss_fn`; a
    # concrete conv classifier + CrossEntropyLoss is instantiated here so the
    # forward can be expressed as a single fused Pallas kernel.
    """

    def __init__(self, params, training=True):
        self.params = params
        self.training = training

    def __call__(self, *args, **kwargs):
        if self.training:
            return self.train_forward(*args, **kwargs)
        return self.test_forward(*args, **kwargs)

    def train_forward(self, x, target):
        # mirrors: loss_fn(self.model(**x), target)
        return _train_fn(self.params, x["image"], target)

    def test_forward(self, x):
        # mirrors: self.model(**x)   (no loss work on this path)
        return _eval_fn(self.params, x["image"])


# ------------------------------ pure-JAX reference -----------------------------
def reference(params, image_nchw, target):
    x = jnp.transpose(image_nchw, (0, 2, 3, 1))
    w = jnp.transpose(params["w_conv"], (2, 3, 1, 0))               # HWIO
    conv = jax.lax.conv_general_dilated(
        x, w, window_strides=(1, 1), padding="SAME",
        dimension_numbers=("NHWC", "HWIO", "NHWC")) + params["b_conv"]
    conv = jnp.maximum(conv, 0.0)
    pooled = conv.mean(axis=(1, 2))
    logits = pooled @ params["w_fc"].T + params["b_fc"]
    lse = jax.nn.logsumexp(logits, axis=-1)
    nll = lse - jnp.take_along_axis(logits, target[:, None], axis=-1)[:, 0]
    return nll.mean(), logits


if __name__ == "__main__":
    key = jax.random.PRNGKey(0)
    kx, kt, kp = jax.random.split(key, 3)
    x_nchw = jax.random.normal(kx, (B, C, H, W), jnp.float32)
    target = jax.random.randint(kt, (B,), 0, NUM_CLASSES)
    params = init_params(kp)

    module = ModelWithLoss(params, training=True)

    # training path: loss_fn(model(**x), target)
    loss = jax.block_until_ready(module({"image": x_nchw}, target))

    # eval path: model(**x)
    module.training = False
    logits = jax.block_until_ready(module({"image": x_nchw}))

    ref_loss, ref_logits = reference(params, x_nchw, target)
    assert jnp.allclose(loss, ref_loss, rtol=1e-3, atol=1e-3), (loss, ref_loss)
    assert jnp.allclose(logits, ref_logits, rtol=1e-3, atol=1e-3)

    print("KERNEL_OK")
</pallas_src>

<mosaic_0001>
module attributes {stable_mosaic.version = 11 : i64} {
  func.func @_train_kernel(%arg0: i32, %arg1: memref<2xi32, #tpu.memory_space<smem>>, %arg2: memref<36x72xf32, #tpu.memory_space<vmem>>, %arg3: memref<216x128xf32, #tpu.memory_space<vmem>>, %arg4: memref<1x128xf32, #tpu.memory_space<vmem>>, %arg5: memref<2x34xf32, #tpu.memory_space<vmem>>, %arg6: memref<128x10xf32, #tpu.memory_space<vmem>>, %arg7: memref<1x10xf32, #tpu.memory_space<vmem>>, %arg8: memref<8x128xf32, #tpu.memory_space<vmem>>) attributes {dimension_semantics = [#tpu.dimension_semantics<arbitrary>], iteration_bounds = array<i64: 1>, scalar_prefetch = 1 : i64, scratch_operands = 0 : i64, tpu.core_type = #tpu.core_type<tc>, window_params = [{pipeline_mode = #tpu.pipeline_mode<synchronous>, transform_indices = @transform_0, window_bounds = array<i64: 36, 72>}, {pipeline_mode = #tpu.pipeline_mode<synchronous>, transform_indices = @transform_1, window_bounds = array<i64: 216, 128>}, {pipeline_mode = #tpu.pipeline_mode<synchronous>, transform_indices = @transform_2, window_bounds = array<i64: 1, 128>}, {pipeline_mode = #tpu.pipeline_mode<synchronous>, transform_indices = @transform_3, window_bounds = array<i64: 2, 34>}, {pipeline_mode = #tpu.pipeline_mode<synchronous>, transform_indices = @transform_4, window_bounds = array<i64: 128, 10>}, {pipeline_mode = #tpu.pipeline_mode<synchronous>, transform_indices = @transform_5, window_bounds = array<i64: 1, 10>}, {pipeline_mode = #tpu.pipeline_mode<synchronous>, transform_indices = @transform_6, window_bounds = array<i64: 8, 128>}]} {
    %c0 = arith.constant 0 : index
    %c0_0 = arith.constant 0 : index
    %0 = vector.load %arg2[%c0, %c0_0] : memref<36x72xf32, #tpu.memory_space<vmem>>, vector<36x72xf32>
    %cst = arith.constant 0.000000e+00 : f32
    %1 = vector.broadcast %cst : f32 to vector<34x128xf32>
    %2 = vector.extract_strided_slice %0 {offsets = [0, 0], sizes = [34, 72], strides = [1, 1]} : vector<36x72xf32> to vector<34x72xf32>
    %c0_1 = arith.constant 0 : index
    %c0_2 = arith.constant 0 : index
    %3 = vector.load %arg3[%c0_1, %c0_2] : memref<216x128xf32, #tpu.memory_space<vmem>>, vector<72x128xf32>
    %cst_3 = arith.constant dense<0.000000e+00> : vector<34x128xf32>
    %4 = tpu.matmul %2, %3, %cst_3 {dimension_numbers = #tpu.dot_dimension_numbers<[1], [0], [0], [1], [0, 0, 1, 1], [], []>} : vector<34x72xf32>, vector<72x128xf32>, vector<34x128xf32> -> vector<34x128xf32>
    %5 = arith.addf %1, %4 : vector<34x128xf32>
    %6 = vector.extract_strided_slice %0 {offsets = [1, 0], sizes = [34, 72], strides = [1, 1]} : vector<36x72xf32> to vector<34x72xf32>
    %c72 = arith.constant 72 : index
    %c0_4 = arith.constant 0 : index
    %7 = vector.load %arg3[%c72, %c0_4] : memref<216x128xf32, #tpu.memory_space<vmem>>, vector<72x128xf32>
    %cst_5 = arith.constant dense<0.000000e+00> : vector<34x128xf32>
    %8 = tpu.matmul %6, %7, %cst_5 {dimension_numbers = #tpu.dot_dimension_numbers<[1], [0], [0], [1], [0, 0, 1, 1], [], []>} : vector<34x72xf32>, vector<72x128xf32>, vector<34x128xf32> -> vector<34x128xf32>
    %9 = arith.addf %5, %8 : vector<34x128xf32>
    %10 = vector.extract_strided_slice %0 {offsets = [2, 0], sizes = [34, 72], strides = [1, 1]} : vector<36x72xf32> to vector<34x72xf32>
    %c144 = arith.constant 144 : index
    %c0_6 = arith.constant 0 : index
    %11 = vector.load %arg3[%c144, %c0_6] : memref<216x128xf32, #tpu.memory_space<vmem>>, vector<72x128xf32>
    %cst_7 = arith.constant dense<0.000000e+00> : vector<34x128xf32>
    %12 = tpu.matmul %10, %11, %cst_7 {dimension_numbers = #tpu.dot_dimension_numbers<[1], [0], [0], [1], [0, 0, 1, 1], [], []>} : vector<34x72xf32>, vector<72x128xf32>, vector<34x128xf32> -> vector<34x128xf32>
    %13 = arith.addf %9, %12 : vector<34x128xf32>
    %c0_8 = arith.constant 0 : index
    %c0_9 = arith.constant 0 : index
    %14 = vector.load %arg4[%c0_8, %c0_9] : memref<1x128xf32, #tpu.memory_space<vmem>>, vector<1x128xf32>
    %15 = vector.broadcast %14 : vector<1x128xf32> to vector<34x128xf32>
    %16 = arith.addf %13, %15 : vector<34x128xf32>
    %cst_10 = arith.constant 0.000000e+00 : f32
    %17 = vector.broadcast %cst_10 : f32 to vector<34x128xf32>
    %18 = arith.maximumf %16, %17 : vector<34x128xf32>
    %c0_11 = arith.constant 0 : index
    %c0_12 = arith.constant 0 : index
    %19 = vector.load %arg5[%c0_11, %c0_12] : memref<2x34xf32, #tpu.memory_space<vmem>>, vector<2x34xf32>
    %cst_13 = arith.constant dense<0.000000e+00> : vector<2x128xf32>
    %20 = tpu.matmul %19, %18, %cst_13 {dimension_numbers = #tpu.dot_dimension_numbers<[1], [0], [0], [1], [0, 0, 1, 1], [], []>} : vector<2x34xf32>, vector<34x128xf32>, vector<2x128xf32> -> vector<2x128xf32>
    %c0_14 = arith.constant 0 : index
    %c0_15 = arith.constant 0 : index
    %21 = vector.load %arg6[%c0_14, %c0_15] : memref<128x10xf32, #tpu.memory_space<vmem>>, vector<128x10xf32>
    %cst_16 = arith.constant dense<0.000000e+00> : vector<2x10xf32>
    %22 = tpu.matmul %20, %21, %cst_16 {dimension_numbers = #tpu.dot_dimension_numbers<[1], [0], [0], [1], [0, 0, 1, 1], [], []>} : vector<2x128xf32>, vector<128x10xf32>, vector<2x10xf32> -> vector<2x10xf32>
    %c0_17 = arith.constant 0 : index
    %c0_18 = arith.constant 0 : index
    %23 = vector.load %arg7[%c0_17, %c0_18] : memref<1x10xf32, #tpu.memory_space<vmem>>, vector<1x10xf32>
    %24 = vector.broadcast %23 : vector<1x10xf32> to vector<2x10xf32>
    %25 = arith.addf %22, %24 : vector<2x10xf32>
    %cst_19 = arith.constant dense<0xFF800000> : vector<2xf32>
    %26 = vector.multi_reduction <maximumf>, %25, %cst_19 [1] : vector<2x10xf32> to vector<2xf32>
    %27 = vector.shape_cast %26 : vector<2xf32> to vector<2x1xf32>
    %28 = vector.broadcast %27 : vector<2x1xf32> to vector<2x10xf32>
    %29 = arith.subf %25, %28 : vector<2x10xf32>
    %30 = math.exp %29 : vector<2x10xf32>
    %cst_20 = arith.constant dense<0.000000e+00> : vector<2xf32>
    %31 = vector.multi_reduction <add>, %30, %cst_20 [1] : vector<2x10xf32> to vector<2xf32>
    %32 = vector.shape_cast %31 : vector<2xf32> to vector<2x1xf32>
    %33 = math.log %32 : vector<2x1xf32>
    %34 = arith.addf %27, %33 : vector<2x1xf32>
    %35 = tpu.iota {dimensions = array<i32: 1>} : vector<2x10xi32>
    %c0_21 = arith.constant 0 : index
    %36 = memref.load %arg1[%c0_21] : memref<2xi32, #tpu.memory_space<smem>>
    %37 = vector.broadcast %36 : i32 to vector<1x1xi32>
    %c1 = arith.constant 1 : index
    %38 = memref.load %arg1[%c1] : memref<2xi32, #tpu.memory_space<smem>>
    %39 = vector.broadcast %38 : i32 to vector<1x1xi32>
    %40 = tpu.concatenate %37, %39 in 0 : vector<1x1xi32>, vector<1x1xi32> -> vector<2x1xi32>
    %41 = vector.broadcast %40 : vector<2x1xi32> to vector<2x10xi32>
    %42 = arith.cmpi eq, %35, %41 : vector<2x10xi32>
    %cst_22 = arith.constant 0.000000e+00 : f32
    %43 = vector.broadcast %cst_22 : f32 to vector<2x10xf32>
    %44 = arith.select %42, %25, %43 : vector<2x10xi1>, vector<2x10xf32>
    %cst_23 = arith.constant dense<0.000000e+00> : vector<2xf32>
    %45 = vector.multi_reduction <add>, %44, %cst_23 [1] : vector<2x10xf32> to vector<2xf32>
    %46 = vector.shape_cast %45 : vector<2xf32> to vector<2x1xf32>
    %47 = arith.subf %34, %46 : vector<2x1xf32>
    %cst_24 = arith.constant dense<0.000000e+00> : vector<1xf32>
    %48 = vector.multi_reduction <add>, %47, %cst_24 [0] : vector<2x1xf32> to vector<1xf32>
    %49 = vector.shape_cast %48 : vector<1xf32> to vector<1x1xf32>
    %cst_25 = arith.constant 5.000000e-01 : f32
    %50 = vector.broadcast %cst_25 : f32 to vector<1x1xf32>
    %51 = arith.mulf %49, %50 : vector<1x1xf32>
    %cst_26 = arith.constant 0.000000e+00 : f32
    %52 = vector.broadcast %cst_26 : f32 to vector<8x128xf32>
    %53 = vector.broadcast %51 : vector<1x1xf32> to vector<8x128xf32>
    %54 = arith.addf %52, %53 : vector<8x128xf32>
    %c0_27 = arith.constant 0 : index
    %c0_28 = arith.constant 0 : index
    %55 = vector.load %arg8[%c0_27, %c0_28] : memref<8x128xf32, #tpu.memory_space<vmem>>, vector<8x128xf32>
    tpu.vector_store %arg8[%c0_27, %c0_28], %54 {strides = array<i32>} : memref<8x128xf32, #tpu.memory_space<vmem>>, vector<8x128xf32>,
    return
  }
  func.func @transform_0(%arg0: i32, %arg1: memref<2xi32, #tpu.memory_space<smem>>) -> (i32, i32) {
    %c0_i32 = arith.constant 0 : i32
    %c0_i32_0 = arith.constant 0 : i32
    %c0_i32_1 = arith.constant 0 : i32
    return %c0_i32, %c0_i32_0 : i32, i32
  }
  func.func @transform_1(%arg0: i32, %arg1: memref<2xi32, #tpu.memory_space<smem>>) -> (i32, i32) {
    %c0_i32 = arith.constant 0 : i32
    %c0_i32_0 = arith.constant 0 : i32
    %c0_i32_1 = arith.constant 0 : i32
    return %c0_i32, %c0_i32_0 : i32, i32
  }
  func.func @transform_2(%arg0: i32, %arg1: memref<2xi32, #tpu.memory_space<smem>>) -> (i32, i32) {
    %c0_i32 = arith.constant 0 : i32
    %c0_i32_0 = arith.constant 0 : i32
    %c0_i32_1 = arith.constant 0 : i32
    return %c0_i32, %c0_i32_0 : i32, i32
  }
  func.func @transform_3(%arg0: i32, %arg1: memref<2xi32, #tpu.memory_space<smem>>) -> (i32, i32) {
    %c0_i32 = arith.constant 0 : i32
    %c0_i32_0 = arith.constant 0 : i32
    %c0_i32_1 = arith.constant 0 : i32
    return %c0_i32, %c0_i32_0 : i32, i32
  }
  func.func @transform_4(%arg0: i32, %arg1: memref<2xi32, #tpu.memory_space<smem>>) -> (i32, i32) {
    %c0_i32 = arith.constant 0 : i32
    %c0_i32_0 = arith.constant 0 : i32
    %c0_i32_1 = arith.constant 0 : i32
    return %c0_i32, %c0_i32_0 : i32, i32
  }
  func.func @transform_5(%arg0: i32, %arg1: memref<2xi32, #tpu.memory_space<smem>>) -> (i32, i32) {
    %c0_i32 = arith.constant 0 : i32
    %c0_i32_0 = arith.constant 0 : i32
    %c0_i32_1 = arith.constant 0 : i32
    return %c0_i32, %c0_i32_0 : i32, i32
  }
  func.func @transform_6(%arg0: i32, %arg1: memref<2xi32, #tpu.memory_space<smem>>) -> (i32, i32) {
    %c0_i32 = arith.constant 0 : i32
    %c0_i32_0 = arith.constant 0 : i32
    %c0_i32_1 = arith.constant 0 : i32
    return %c0_i32, %c0_i32_0 : i32, i32
  }
}

</mosaic_0001>

<llo_original>
// kernel: tile.13
$region0: #{tile.13}
  #allocation0 [shape = 's32[1]{0}', space=sflag, size = 0x4, scoped, tag = 'scoped memory for tile.13']
  %s0 = inlined_call_operand.vmem [shape: f32[8], index: 0, kind: input, shape index: {}]
  %s1 = inlined_call_operand.vmem [shape: f32[16,8], index: 1, kind: output, shape index: {}]
  // Predicated region
  $region2: #{tile.13} parent=0 // pred_check
    _
  $region3: #{tile.13} parent=0 // pred_check_branch
    %3 = sbr.rel (0) target = $region5
  $region4: #{tile.13} parent=0 // pred_region
    _
  $region5: #{tile.13} parent=0 // pred_fallthru
    _
  %v4 = vld [vmem:[%s0] ss:$0 sm:$0xff]
  %5 = vst [vmem:[%s1] sm:$0xff] %v4
  %s6 = scalar_lea.vmem %s1, 8
  %7 = vst [vmem:[%s6] sm:$0xff] %v4

// kernel: tile.14
$region0: #{tile.14}
  %s0 = inlined_call_operand.vmem [shape: f32[16,8], index: 0, kind: input, shape index: {}]
  %s1 = inlined_call_operand.vmem [shape: f32[1,128], index: 1, kind: output, shape index: {}]
  $region1: #{tile.14} parent=0
    #allocation0 [shape = 'u8[4096]{0}', space=vmem, size = 0x1000, scoped, tag = 'scoped mem for output reshape']
    %v2 = vld [vmem:[%s0] sm:$0x1]
    %vm3 = vcmask 64512
    %4 = vst.msk [vmem:[#allocation0] sm:$0x1] %vm3, %v2
    %s5 = scalar_lea.vmem %s0, 15
    %v6 = vld [vmem:[%s5] sm:$0x1]
    %7 = vrot.lane.b32.xlu0 %v6, 120
    %v8 = vpop.permute.xlu0 %7
    %vm9 = vcmask 1048512
    %10 = vst.msk [vmem:[#allocation0] sm:$0x1] %vm9, %v8
    %s11 = scalar_lea.vmem %s0, 14
    %v12 = vld [vmem:[%s11] sm:$0x1]
    %13 = vrot.lane.b32.xlu0 %v12, 112
    %v14 = vpop.permute.xlu0 %13
    %vm15 = vcmask 982912
    %16 = vst.msk [vmem:[#allocation0] sm:$0x1] %vm15, %v14
    %s17 = scalar_lea.vmem %s0, 13
    %v18 = vld [vmem:[%s17] sm:$0x1]
    %19 = vrot.lane.b32.xlu0 %v18, 104
    %v20 = vpop.permute.xlu0 %19
    %vm21 = vcmask 917312
    %22 = vst.msk [vmem:[#allocation0] sm:$0x1] %vm21, %v20
    %s23 = scalar_lea.vmem %s0, 12
    %v24 = vld [vmem:[%s23] sm:$0x1]
    %25 = vrot.lane.b32.xlu0 %v24, 96
    %v26 = vpop.permute.xlu0 %25
    %vm27 = vcmask 851712
    %28 = vst.msk [vmem:[#allocation0] sm:$0x1] %vm27, %v26
    %s29 = scalar_lea.vmem %s0, 11
    %v30 = vld [vmem:[%s29] sm:$0x1]
    %31 = vrot.lane.b32.xlu0 %v30, 88
    %v32 = vpop.permute.xlu0 %31
    %vm33 = vcmask 786112
    %34 = vst.msk [vmem:[#allocation0] sm:$0x1] %vm33, %v32
    %s35 = scalar_lea.vmem %s0, 10
    %v36 = vld [vmem:[%s35] sm:$0x1]
    %37 = vrot.lane.b32.xlu0 %v36, 80
    %v38 = vpop.permute.xlu0 %37
    %vm39 = vcmask 720512
    %40 = vst.msk [vmem:[#allocation0] sm:$0x1] %vm39, %v38
    %s41 = scalar_lea.vmem %s0, 9
    %v42 = vld [vmem:[%s41] sm:$0x1]
    %43 = vrot.lane.b32.xlu0 %v42, 72
    %v44 = vpop.permute.xlu0 %43
    %vm45 = vcmask 654912
    %46 = vst.msk [vmem:[#allocation0] sm:$0x1] %vm45, %v44
    %s47 = scalar_lea.vmem %s0, 8
    %v48 = vld [vmem:[%s47] sm:$0x1]
    %49 = vrot.lane.b32.xlu0 %v48, 64
    %v50 = vpop.permute.xlu0 %49
    %vm51 = vcmask 589312
    %52 = vst.msk [vmem:[#allocation0] sm:$0x1] %vm51, %v50
    %s53 = scalar_lea.vmem %s0, 7
    %v54 = vld [vmem:[%s53] sm:$0x1]
    %55 = vrot.lane.b32.xlu0 %v54, 56
    %v56 = vpop.permute.xlu0 %55
    %vm57 = vcmask 523712
    %58 = vst.msk [vmem:[#allocation0] sm:$0x1] %vm57, %v56
    %s59 = scalar_lea.vmem %s0, 6
    %v60 = vld [vmem:[%s59] sm:$0x1]
    %61 = vrot.lane.b32.xlu0 %v60, 48
    %v62 = vpop.permute.xlu0 %61
    %vm63 = vcmask 458112
    %64 = vst.msk [vmem:[#allocation0] sm:$0x1] %vm63, %v62
    %s65 = scalar_lea.vmem %s0, 5
    %v66 = vld [vmem:[%s65] sm:$0x1]
    %67 = vrot.lane.b32.xlu0 %v66, 40
    %v68 = vpop.permute.xlu0 %67
    %vm69 = vcmask 392512
    %70 = vst.msk [vmem:[#allocation0] sm:$0x1] %vm69, %v68
    %s71 = scalar_lea.vmem %s0, 4
    %v72 = vld [vmem:[%s71] sm:$0x1]
    %73 = vrot.lane.b32.xlu0 %v72, 32
    %v74 = vpop.permute.xlu0 %73
    %vm75 = vcmask 326912
    %76 = vst.msk [vmem:[#allocation0] sm:$0x1] %vm75, %v74
    %s77 = scalar_lea.vmem %s0, 3
    %v78 = vld [vmem:[%s77] sm:$0x1]
    %79 = vrot.lane.b32.xlu0 %v78, 24
    %v80 = vpop.permute.xlu0 %79
    %vm81 = vcmask 261312
    %82 = vst.msk [vmem:[#allocation0] sm:$0x1] %vm81, %v80
    %s83 = scalar_lea.vmem %s0, 2
    %v84 = vld [vmem:[%s83] sm:$0x1]
    %85 = vrot.lane.b32.xlu0 %v84, 16
    %v86 = vpop.permute.xlu0 %85
    %vm87 = vcmask 195712
    %88 = vst.msk [vmem:[#allocation0] sm:$0x1] %vm87, %v86
    %s89 = scalar_lea.vmem %s0, 1
    %v90 = vld [vmem:[%s89] sm:$0x1]
    %91 = vrot.lane.b32.xlu0 %v90, 8
    %v92 = vpop.permute.xlu0 %91
    %vm93 = vcmask 130112
    %94 = vst.msk [vmem:[#allocation0] sm:$0x1] %vm93, %v92
    %s96 = ssub.s32 2, 1
    %v97 = vld [vmem:[#allocation0] sm:%s96]
    %s99 = ssub.s32 2, 1
    %100 = vst [vmem:[%s1] sm:%s99] %v97

// kernel: _train_fn.1
$region0: #{_train_fn.1}
  #allocation0 [shape = 'u32[]', space=smem, size = 0x4, offset = 0x4, fixed_abs, tag = 'smem constant byte address 0x4 - core index']
  #allocation1 [shape = 'u32[72,128]{1,0:T(1,128)}', space=vmem, size = 0x9000, scoped, tag = 'internal scratch']
  #allocation2 [shape = 's32[1]{0}', space=sflag, size = 0x4, scoped, tag = 'scoped memory for _train_fn.1']
  #allocation3 [shape = 'u8[512]{0}', space=smem, size = 0x200, scoped, tag = 'prefetched SMEM operand 0']
  %s0 = inlined_call_operand.vmem [shape: s32[2], index: 0, kind: input, shape index: {}]
  %s1 = inlined_call_operand.vmem [shape: f32[36,72], index: 1, kind: input, shape index: {}]
  %s2 = inlined_call_operand.vmem [shape: f32[216,128], index: 2, kind: input, shape index: {}]
  %s3 = inlined_call_operand.vmem [shape: f32[1,128], index: 3, kind: input, shape index: {}]
  %s4 = inlined_call_operand.vmem [shape: f32[2,34], index: 4, kind: input, shape index: {}]
  %s5 = inlined_call_operand.vmem [shape: f32[128,10], index: 5, kind: input, shape index: {}]
  %s6 = inlined_call_operand.vmem [shape: f32[1,10], index: 6, kind: input, shape index: {}]
  %s7 = inlined_call_operand.vmem [shape: f32[8,128], index: 7, kind: output, shape index: {}]
  %s8 = sld [smem:[#allocation0]]
  $region34: #{_train_fn.1} parent=0
    _
  %s10 = ssub.s32 1, %s8
  %s11 = scalar_select 0, %s10, %s8
  %s13 = sshll.u32 %s0, 4
  %s14 = int_to_ptr.vmem [resolvable:$true] %s13
  %16 = dma.vmem_to_smem %s14, 16, [#allocation3], [#allocation2]
  %18 = dma.done [#allocation2], 16
  %19 = sfence
  // Predicated region
  $region2: #{_train_fn.1} parent=0 // pred_check
    _
  $region3: #{_train_fn.1} parent=0 // pred_check_branch
    %21 = sbr.rel (0) target = $region5
  $region4: #{_train_fn.1} parent=0 // pred_region
    _
  $region5: #{_train_fn.1} parent=0 // pred_fallthru
    _
  // Predicated region
  $region6: #{_train_fn.1} parent=0 // pred_check
    _
  $region7: #{_train_fn.1} parent=0 // pred_check_branch
    %23 = sbr.rel (0) target = $region9
  $region8: #{_train_fn.1} parent=0 // pred_region
    _
  $region9: #{_train_fn.1} parent=0 // pred_fallthru
    _
  // Predicated region
  $region10: #{_train_fn.1} parent=0 // pred_check
    _
  $region11: #{_train_fn.1} parent=0 // pred_check_branch
    %25 = sbr.rel (0) target = $region13
  $region12: #{_train_fn.1} parent=0 // pred_region
    _
  $region13: #{_train_fn.1} parent=0 // pred_fallthru
    _
  // Predicated region
  $region14: #{_train_fn.1} parent=0 // pred_check
    _
  $region15: #{_train_fn.1} parent=0 // pred_check_branch
    %27 = sbr.rel (0) target = $region17
  $region16: #{_train_fn.1} parent=0 // pred_region
    _
  $region17: #{_train_fn.1} parent=0 // pred_fallthru
    _
  // Predicated region
  $region18: #{_train_fn.1} parent=0 // pred_check
    _
  $region19: #{_train_fn.1} parent=0 // pred_check_branch
    %29 = sbr.rel (0) target = $region21
  $region20: #{_train_fn.1} parent=0 // pred_region
    _
  $region21: #{_train_fn.1} parent=0 // pred_fallthru
    _
  // Predicated region
  $region22: #{_train_fn.1} parent=0 // pred_check
    _
  $region23: #{_train_fn.1} parent=0 // pred_check_branch
    %31 = sbr.rel (0) target = $region25
  $region24: #{_train_fn.1} parent=0 // pred_region
    _
  $region25: #{_train_fn.1} parent=0 // pred_fallthru
    _
  %v32 = vld [vmem:[%s1] sm:$0xff]
  %v33 = vld [vmem:[%s1 + $0x8] sm:$0xff]
  %v34 = vld [vmem:[%s1 + $0x10] sm:$0xff]
  %v35 = vld [vmem:[%s1 + $0x18] sm:$0xff]
  %v36 = vld [vmem:[%s1 + $0x20] sm:$0xf]
  %v37 = vld [vmem:[%s2] sm:$0xff]
  %v38 = vld [vmem:[%s2 + $0x8] sm:$0xff]
  %v39 = vld [vmem:[%s2 + $0x10] sm:$0xff]
  %v40 = vld [vmem:[%s2 + $0x18] sm:$0xff]
  %v41 = vld [vmem:[%s2 + $0x20] sm:$0xff]
  %v42 = vld [vmem:[%s2 + $0x28] sm:$0xff]
  %v43 = vld [vmem:[%s2 + $0x30] sm:$0xff]
  %v44 = vld [vmem:[%s2 + $0x38] sm:$0xff]
  %v45 = vld [vmem:[%s2 + $0x40] sm:$0xff]
  %v46 = vld [vmem:[%s2 + $0x48] sm:$0xff]
  %v47 = vld [vmem:[%s2 + $0x50] sm:$0xff]
  %v48 = vld [vmem:[%s2 + $0x58] sm:$0xff]
  %v49 = vld [vmem:[%s2 + $0x60] sm:$0xff]
  %v50 = vld [vmem:[%s2 + $0x68] sm:$0xff]
  %v51 = vld [vmem:[%s2 + $0x70] sm:$0xff]
  %v52 = vld [vmem:[%s2 + $0x78] sm:$0xff]
  %v53 = vld [vmem:[%s2 + $0x80] sm:$0xff]
  %v54 = vld [vmem:[%s2 + $0x88] sm:$0xff]
  %vm60 = vcmask 1046528
  %v61 = vrot.slane %v32, 1
  %v62 = vrot.slane %v33, 1
  %v63 = vsel %vm60, %v61, %v62
  %v64 = vrot.slane %v34, 1
  %v65 = vsel %vm60, %v62, %v64
  %v66 = vrot.slane %v35, 1
  %v67 = vsel %vm60, %v64, %v66
  %v68 = vrot.slane %v36, 1
  %v69 = vsel %vm60, %v66, %v68
  %vm70 = vcmask 588800
  %v71 = vsel %vm70, %v63, 0
  %v73 = vsel %vm70, %v65, 0
  %v75 = vsel %vm70, %v67, 0
  %v77 = vsel %vm70, %v69, 0
  %v79 = vsel %vm70, %v68, 0
  %81 = vmatpush.msra.mxu0 0.0
  %82 = vmatpush.msra.mxu0 0.0
  %83 = vmatpush.msra.mxu0 0.0
  %84 = vmatpush.msra.mxu0 0.0
  %85 = vmatpush.msra.mxu0 0.0
  %86 = vmatpush.msra.mxu0 0.0
  %87 = vmatpush.msra.mxu0 0.0
  %88 = vmatpush.msra.mxu0 %v54
  %89 = vmatpush.msra.mxu0 %v53
  %90 = vmatpush.msra.mxu0 %v52
  %91 = vmatpush.msra.mxu0 %v51
  %92 = vmatpush.msra.mxu0 %v50
  %93 = vmatpush.msra.mxu0 %v49
  %94 = vmatpush.msra.mxu0 %v48
  %95 = vmatpush.msra.mxu0 %v47
  %96 = vmatpush.msra.mxu0 %v46
  %97 = vmatmul.f32.gmra.mxu0 %v71
  %v98 = vpop.f32.mrf.mxu0
  %v99 = vadd.f32 0.0, %v98
  %100 = vmatmul.f32.gmra.mxu0 %v73
  %v101 = vpop.f32.mrf.mxu0
  %v102 = vadd.f32 0.0, %v101
  %103 = vmatmul.f32.gmra.mxu0 %v75
  %v104 = vpop.f32.mrf.mxu0
  %v105 = vadd.f32 0.0, %v104
  %106 = vmatmul.f32.gmra.mxu0 %v77
  %v107 = vpop.f32.mrf.mxu0
  %v108 = vadd.f32 0.0, %v107
  %109 = vmatmul.f32.gmra.mxu0 %v79
  %v110 = vpop.f32.mrf.mxu0
  %v111 = vadd.f32 0.0, %v110
  %112 = vdwg.mxu0
  %v113 = vsel %vm70, %v32, 0
  %v115 = vsel %vm70, %v33, 0
  %v117 = vsel %vm70, %v34, 0
  %v119 = vsel %vm70, %v35, 0
  %v121 = vsel %vm70, %v36, 0
  %123 = vmatpush.msra.mxu0 0.0
  %124 = vmatpush.msra.mxu0 0.0
  %125 = vmatpush.msra.mxu0 0.0
  %126 = vmatpush.msra.mxu0 0.0
  %127 = vmatpush.msra.mxu0 0.0
  %128 = vmatpush.msra.mxu0 0.0
  %129 = vmatpush.msra.mxu0 0.0
  %130 = vmatpush.msra.mxu0 %v45
  %131 = vmatpush.msra.mxu0 %v44
  %132 = vmatpush.msra.mxu0 %v43
  %133 = vmatpush.msra.mxu0 %v42
  %134 = vmatpush.msra.mxu0 %v41
  %135 = vmatpush.msra.mxu0 %v40
  %136 = vmatpush.msra.mxu0 %v39
  %137 = vmatpush.msra.mxu0 %v38
  %138 = vmatpush.msra.mxu0 %v37
  %139 = vmatmul.f32.gmra.mxu0 %v113
  %v140 = vpop.f32.mrf.mxu0
  %v141 = vadd.f32 %v99, %v140
  %142 = vmatmul.f32.gmra.mxu0 %v115
  %v143 = vpop.f32.mrf.mxu0
  %v144 = vadd.f32 %v102, %v143
  %145 = vmatmul.f32.gmra.mxu0 %v117
  %v146 = vpop.f32.mrf.mxu0
  %v147 = vadd.f32 %v105, %v146
  %148 = vmatmul.f32.gmra.mxu0 %v119
  %v149 = vpop.f32.mrf.mxu0
  %v150 = vadd.f32 %v108, %v149
  %151 = vmatmul.f32.gmra.mxu0 %v121
  %v152 = vpop.f32.mrf.mxu0
  %v153 = vadd.f32 %v111, %v152
  %154 = vdwg.mxu0
  %v155 = vld [vmem:[%s2 + $0x90] sm:$0xff]
  %v156 = vld [vmem:[%s2 + $0x98] sm:$0xff]
  %v157 = vld [vmem:[%s2 + $0xa0] sm:$0xff]
  %v158 = vld [vmem:[%s2 + $0xa8] sm:$0xff]
  %v159 = vld [vmem:[%s2 + $0xb0] sm:$0xff]
  %v160 = vld [vmem:[%s2 + $0xb8] sm:$0xff]
  %v161 = vld [vmem:[%s2 + $0xc0] sm:$0xff]
  %v162 = vld [vmem:[%s2 + $0xc8] sm:$0xff]
  %v163 = vld [vmem:[%s2 + $0xd0] sm:$0xff]
  %vm164 = vcmask 1045504
  %v165 = vrot.slane %v32, 2
  %v166 = vrot.slane %v33, 2
  %v167 = vsel %vm164, %v165, %v166
  %v168 = vrot.slane %v34, 2
  %v169 = vsel %vm164, %v166, %v168
  %v170 = vrot.slane %v35, 2
  %v171 = vsel %vm164, %v168, %v170
  %v172 = vrot.slane %v36, 2
  %v173 = vsel %vm164, %v170, %v172
  %v174 = vsel %vm70, %v167, 0
  %v176 = vsel %vm70, %v169, 0
  %v178 = vsel %vm70, %v171, 0
  %v180 = vsel %vm70, %v173, 0
  %v182 = vsel %vm70, %v172, 0
  %184 = vmatpush.msra.mxu0 0.0
  %185 = vmatpush.msra.mxu0 0.0
  %186 = vmatpush.msra.mxu0 0.0
  %187 = vmatpush.msra.mxu0 0.0
  %188 = vmatpush.msra.mxu0 0.0
  %189 = vmatpush.msra.mxu0 0.0
  %190 = vmatpush.msra.mxu0 0.0
  %191 = vmatpush.msra.mxu0 %v163
  %192 = vmatpush.msra.mxu0 %v162
  %193 = vmatpush.msra.mxu0 %v161
  %194 = vmatpush.msra.mxu0 %v160
  %195 = vmatpush.msra.mxu0 %v159
  %196 = vmatpush.msra.mxu0 %v158
  %197 = vmatpush.msra.mxu0 %v157
  %198 = vmatpush.msra.mxu0 %v156
  %199 = vmatpush.msra.mxu0 %v155
  %200 = vmatmul.f32.gmra.mxu0 %v174
  %v201 = vpop.f32.mrf.mxu0
  %v202 = vadd.f32 0.0, %v201
  %203 = vmatmul.f32.gmra.mxu0 %v176
  %v204 = vpop.f32.mrf.mxu0
  %v205 = vadd.f32 0.0, %v204
  %206 = vmatmul.f32.gmra.mxu0 %v178
  %v207 = vpop.f32.mrf.mxu0
  %v208 = vadd.f32 0.0, %v207
  %209 = vmatmul.f32.gmra.mxu0 %v180
  %v210 = vpop.f32.mrf.mxu0
  %v211 = vadd.f32 0.0, %v210
  %212 = vmatmul.f32.gmra.mxu0 %v182
  %v213 = vpop.f32.mrf.mxu0
  %v214 = vadd.f32 0.0, %v213
  %215 = vdwg.mxu0
  %v216 = vadd.f32 %v141, %v202
  %v217 = vadd.f32 %v144, %v205
  %v218 = vadd.f32 %v147, %v208
  %v219 = vadd.f32 %v150, %v211
  %v220 = vadd.f32 %v153, %v214
  %v221 = vld [vmem:[%s3] sm:$0x1]
  %v223 = vperm.slane %v221, 0
  %v225 = vadd.f32 %v216, %v223
  %v226 = vadd.f32 %v217, %v223
  %v227 = vadd.f32 %v218, %v223
  %v228 = vadd.f32 %v219, %v223
  %v229 = vadd.f32 %v220, %v223
  %v230 = vmax.f32 %v225, 0.0
  %v231 = vmax.f32 %v226, 0.0
  %v232 = vmax.f32 %v227, 0.0
  %v233 = vmax.f32 %v228, 0.0
  %v234 = vmax.f32 %v229, 0.0
  %v235 = vld [vmem:[%s4] sm:$0x3]
  %vm236 = vcmask 277504
  %v238 = vsel %vm236, %v235, 0
  %vm240 = vcmask 1041408
  %v242 = vsel %vm240, %v234, 0
  %244 = vmatpush.msra.mxu0 0.0
  %245 = vmatpush.msra.mxu0 0.0
  %246 = vmatpush.msra.mxu0 0.0
  %247 = vmatpush.msra.mxu0 0.0
  %248 = vmatpush.msra.mxu0 0.0
  %249 = vmatpush.msra.mxu0 0.0
  %250 = vmatpush.msra.mxu0 0.0
  %251 = vmatpush.msra.mxu0 0.0
  %252 = vmatpush.msra.mxu0 0.0
  %253 = vmatpush.msra.mxu0 0.0
  %254 = vmatpush.msra.mxu0 0.0
  %255 = vmatpush.msra.mxu0 %v242
  %256 = vmatpush.msra.mxu0 %v233
  %257 = vmatpush.msra.mxu0 %v232
  %258 = vmatpush.msra.mxu0 %v231
  %259 = vmatpush.msra.mxu0 %v230
  %260 = vmatmul.f32.gmra.mxu0 %v238
  %v261 = vpop.f32.mrf.mxu0
  %v262 = vadd.f32 0.0, %v261
  %263 = vdwg.mxu0
  %v264 = vld [vmem:[%s5] sm:$0xff]
  %v265 = vld [vmem:[%s5 + $0x8] sm:$0xff]
  %v266 = vld [vmem:[%s5 + $0x10] sm:$0xff]
  %v267 = vld [vmem:[%s5 + $0x18] sm:$0xff]
  %v268 = vld [vmem:[%s5 + $0x20] sm:$0xff]
  %v269 = vld [vmem:[%s5 + $0x28] sm:$0xff]
  %v270 = vld [vmem:[%s5 + $0x30] sm:$0xff]
  %v271 = vld [vmem:[%s5 + $0x38] sm:$0xff]
  %v272 = vld [vmem:[%s5 + $0x40] sm:$0xff]
  %v273 = vld [vmem:[%s5 + $0x48] sm:$0xff]
  %v274 = vld [vmem:[%s5 + $0x50] sm:$0xff]
  %v275 = vld [vmem:[%s5 + $0x58] sm:$0xff]
  %v276 = vld [vmem:[%s5 + $0x60] sm:$0xff]
  %v277 = vld [vmem:[%s5 + $0x68] sm:$0xff]
  %v278 = vld [vmem:[%s5 + $0x70] sm:$0xff]
  %v279 = vld [vmem:[%s5 + $0x78] sm:$0xff]
  %v280 = vld [vmem:[%s6] sm:$0x1]
  %v282 = vperm.slane %v280, 0
  %284 = vmatpush.msra.mxu0 %v279
  %285 = vmatpush.msra.mxu0 %v278
  %286 = vmatpush.msra.mxu0 %v277
  %287 = vmatpush.msra.mxu0 %v276
  %288 = vmatpush.msra.mxu0 %v275
  %289 = vmatpush.msra.mxu0 %v274
  %290 = vmatpush.msra.mxu0 %v273
  %291 = vmatpush.msra.mxu0 %v272
  %292 = vmatpush.msra.mxu0 %v271
  %293 = vmatpush.msra.mxu0 %v270
  %294 = vmatpush.msra.mxu0 %v269
  %295 = vmatpush.msra.mxu0 %v268
  %296 = vmatpush.msra.mxu0 %v267
  %297 = vmatpush.msra.mxu0 %v266
  %298 = vmatpush.msra.mxu0 %v265
  %299 = vmatpush.msra.mxu0 %v264
  %300 = vmatmul.f32.gmra.mxu0 %v262
  %v301 = vpop.f32.mrf.mxu0
  %v302 = vadd.f32 %v282, %v301
  %303 = vdwg.mxu0
  %vm304 = vcmask 74752
  %v305 = vsel %vm304, %v302, -inf
  %306 = vmax.xlane.f32.xlu0 %v305
  %v307 = vpop.xlane.xlu0 %306
  %v308 = vsub.f32 %v302, %v307
  %v309 = vmul.f32 %v308, 1.442695
  %v310 = vpow.pop %v309
  %v311 = vsel %vm304, %v310, 0.0
  %312 = vadd.xlane.f32.xlu0 %v311
  %v313 = vpop.xlane.xlu0 %312
  %v314 = vlog2.pop %v313
  %v315 = vmul.f32 %v314, 0.6931472
  %v316 = vadd.f32 %v307, %v315
  %v317 = vlaneseq
  %v318 = vand.u32 %v317, 127
  %s319 = sld [smem:[#allocation3]]
  %v320 = vstv %s319
  %s321 = sld [smem:[#allocation3 + $0x1]]
  %v322 = vstv %s321
  %vm323 = vcmask 1040384
  %v324 = vsel %vm323, %v320, %v322
  %325 = vset.pattern.permute.xlu0 0
  %326 = vperm.xlu0 %325, %v324
  %v327 = vpop.permute.xlu0 %326
  %vm328 = vcmp.eq.s32.totalorder %v318, %v327
  %v329 = vsel %vm328, %v302, 0.0
  %v330 = vsel %vm304, %v329, 0.0
  %331 = vadd.xlane.f32.xlu0 %v330
  %v332 = vpop.xlane.xlu0 %331
  %v333 = vsub.f32 %v316, %v332
  %v334 = vsel %vm240, %v333, 0.0
  %v335 = vrot.slane %v334, 4
  %v336 = vadd.f32 %v334, %v335
  %v337 = vrot.slane %v336, 2
  %v338 = vadd.f32 %v336, %v337
  %v339 = vrot.slane %v338, 1
  %v340 = vadd.f32 %v338, %v339
  %v341 = vmul.f32 %v340, 0.5
  %v342 = vadd.f32 %v341, 0.0
  %343 = vst [vmem:[%s7] sm:$0xff] %v342
  // Predicated region
  $region26: #{_train_fn.1} parent=0 // pred_check
    _
  $region27: #{_train_fn.1} parent=0 // pred_check_branch
    %345 = sbr.rel (0) target = $region29
  $region28: #{_train_fn.1} parent=0 // pred_region
    _
  $region29: #{_train_fn.1} parent=0 // pred_fallthru
    _
  // Predicated region
  $region30: #{_train_fn.1} parent=0 // pred_check
    _
  $region31: #{_train_fn.1} parent=0 // pred_check_branch
    %347 = sbr.rel (0) target = $region33
  $region32: #{_train_fn.1} parent=0 // pred_region
    _
  $region33: #{_train_fn.1} parent=0 // pred_fallthru
    _

</llo_original>
